<compile_context>
chip_gen: v6e
topology: v6e:2x2x1
jax: 0.10.0
libtpu: 0.0.40
codegen_flags: <defaults>
</compile_context>

<pallas_src>
import functools

import jax
import jax.numpy as jnp
from jax.experimental import pallas as pl
from jax.experimental.pallas import tpu as pltpu


def _convblock_kernel(xp_ref, w_ref, b_ref, o_ref, *, K, dilation, L_out):
    """One batch element per grid step.

    xp_ref: (1, C_in, L_in)    bf16 zero-padded input (conv halo + lane padding to 128)
    w_ref : (K, C_out, C_in)   bf16 BN-folded conv weight, tap-major (resident)
    b_ref : (C_out, 1)         f32 BN-folded bias (resident)
    o_ref : (1, C_out, L_out)  f32, L_out % 128 == 0 -> unmasked lane-dense stores
    """
    acc = jnp.zeros(o_ref.shape[1:], jnp.float32)
    # Conv1d (stride=1) as K shifted MXU matmuls accumulated in one f32 register chain:
    #   y = sum_k W'_k @ X[:, k*d : k*d + L_out]      (W' already has BN folded in)
    for k in range(K):
        off = k * dilation
        acc = acc + jnp.dot(w_ref[k], xp_ref[0, :, off:off + L_out],
                            preferred_element_type=jnp.float32)
    # BN-folded bias + ReLU (f32 elementwise, safe on v5e).
    y = jnp.maximum(acc + b_ref[...], 0.0)
    # TODO(synk): F.dropout(p=0.3) is identity with training=False (eval); training-mode RNG dropout omitted.
    o_ref[0] = y.astype(o_ref.dtype)


def conv_block_forward(x, w, gamma, beta, running_mean, running_var,
                       *, dilation=1, eps=1e-5, compute_dtype=jnp.bfloat16):
    """x: (N, C_in, L) f32. w: (C_out, C_in, K). Returns (N, C_out, L) in x.dtype."""
    N, C_in, L = x.shape
    C_out, _, K = w.shape

    # --- Fold BatchNorm (eval) into the conv weight and a bias (one-time constant fold). ---
    scale = gamma.astype(jnp.float32) * jax.lax.rsqrt(running_var.astype(jnp.float32) + eps)
    w_folded = w.astype(jnp.float32) * scale[:, None, None]                      # (C_out, C_in, K)
    bias = (beta.astype(jnp.float32)
            - running_mean.astype(jnp.float32) * scale).reshape(C_out, 1)        # (C_out, 1) f32

    # --- PyTorch 'same' padding (stride must be 1): total = dilation*(K-1), left = total//2 ---
    pad_total = dilation * (K - 1)
    pad_l = pad_total // 2

    # Lane-dense output: pad L up to a multiple of 128 so output stores are unmasked.
    L_out = ((L + 127) // 128) * 128
    L_in = L_out + pad_total
    # Single fused cast+pad of x (one HBM pass): left conv halo, right = halo + lane padding.
    x_pad = jnp.pad(x.astype(compute_dtype), ((0, 0), (0, 0), (pad_l, L_in - L - pad_l)))

    # Tap-major bf16 weight for cheap static indexing inside the kernel.
    w_t = jnp.transpose(w_folded, (2, 0, 1)).astype(compute_dtype)               # (K, C_out, C_in)

    kernel = functools.partial(_convblock_kernel, K=K, dilation=dilation, L_out=L_out)

    out = pl.pallas_call(
        kernel,
        out_shape=jax.ShapeDtypeStruct((N, C_out, L_out), x.dtype),
        grid_spec=pltpu.PrefetchScalarGridSpec(
            num_scalar_prefetch=0,
            grid=(N,),
            in_specs=[
                pl.BlockSpec((1, C_in, L_in), lambda n: (n, 0, 0)),      # streamed per batch elem
                pl.BlockSpec((K, C_out, C_in), lambda n: (0, 0, 0)),     # resident weight
                pl.BlockSpec((C_out, 1), lambda n: (0, 0)),              # resident bias
            ],
            out_specs=pl.BlockSpec((1, C_out, L_out), lambda n: (n, 0, 0)),
        ),
        compiler_params=pltpu.CompilerParams(dimension_semantics=("parallel",)),
    )(x_pad, w_t, bias)

    return out[:, :, :L]


if __name__ == "__main__":
    # Small, deterministic setup consistent with ConvBlock(in_channels=4, out_channels=8, kernel_size=3)
    N, C_in, C_out, L, K = 2, 4, 8, 16, 3
    dilation = 1
    eps = 1e-5

    key = jax.random.PRNGKey(0)
    kx, kw, kg, kb, km, kv = jax.random.split(key, 6)
    x = jax.random.normal(kx, (N, C_in, L), dtype=jnp.float32)
    w = jax.random.normal(kw, (C_out, C_in, K), dtype=jnp.float32) * 0.2
    gamma = jax.random.normal(kg, (C_out,), dtype=jnp.float32) * 0.1 + 1.0
    beta = jax.random.normal(kb, (C_out,), dtype=jnp.float32) * 0.1
    running_mean = jax.random.normal(km, (C_out,), dtype=jnp.float32) * 0.1
    running_var = jax.nn.softplus(jax.random.normal(kv, (C_out,), dtype=jnp.float32)) + 0.5

    out = conv_block_forward(x, w, gamma, beta, running_mean, running_var,
                             dilation=dilation, eps=eps)
    out = jax.block_until_ready(out)
    assert out.shape == (N, C_out, L)

    pad_total = dilation * (K - 1)
    pad_l = pad_total // 2
    pad_r = pad_total - pad_l

    # Reference 1: exact module semantics in f32 (loose tol: kernel feeds the MXU with bf16).
    conv_f32 = jax.lax.conv_general_dilated(
        x, w, window_strides=(1,), padding=[(pad_l, pad_r)],
        rhs_dilation=(dilation,), dimension_numbers=("NCH", "OIH", "NCH"))
    bn_f32 = (conv_f32 - running_mean[None, :, None]) / jnp.sqrt(
        running_var[None, :, None] + eps) * gamma[None, :, None] + beta[None, :, None]
    ref_f32 = jnp.maximum(bn_f32, 0.0)
    assert jnp.allclose(out, ref_f32, atol=1e-1, rtol=1e-1), (
        f"loose check: max abs err {jnp.max(jnp.abs(out - ref_f32))}")

    # Reference 2: apply the same BN-fold + bf16 quantization as the kernel (tight tol).
    scale = gamma / jnp.sqrt(running_var + eps)
    w_q = (w * scale[:, None, None]).astype(jnp.bfloat16).astype(jnp.float32)
    bias_q = beta - running_mean * scale
    x_q = x.astype(jnp.bfloat16).astype(jnp.float32)
    conv_q = jax.lax.conv_general_dilated(
        x_q, w_q, window_strides=(1,), padding=[(pad_l, pad_r)],
        rhs_dilation=(dilation,), dimension_numbers=("NCH", "OIH", "NCH"))
    ref_q = jnp.maximum(conv_q + bias_q[None, :, None], 0.0)
    assert jnp.allclose(out, ref_q, atol=1e-3, rtol=1e-3), (
        f"tight check: max abs err {jnp.max(jnp.abs(out - ref_q))}")

    print("KERNEL_OK")
</pallas_src>

<mosaic_0001>
module attributes {stable_mosaic.version = 11 : i64} {
  func.func @_convblock_kernel(%arg0: i32, %arg1: memref<1x4x130xbf16, #tpu.memory_space<vmem>>, %arg2: memref<3x8x4xbf16, #tpu.memory_space<vmem>>, %arg3: memref<8x1xf32, #tpu.memory_space<vmem>>, %arg4: memref<1x8x128xf32, #tpu.memory_space<vmem>>) attributes {dimension_semantics = [#tpu.dimension_semantics<parallel>], iteration_bounds = array<i64: 2>, scalar_prefetch = 0 : i64, scratch_operands = 0 : i64, tpu.core_type = #tpu.core_type<tc>, window_params = [{transform_indices = @transform_0, window_bounds = array<i64: 1, 4, 130>}, {pipeline_mode = #tpu.pipeline_mode<synchronous>, transform_indices = @transform_1, window_bounds = array<i64: 3, 8, 4>}, {pipeline_mode = #tpu.pipeline_mode<synchronous>, transform_indices = @transform_2, window_bounds = array<i64: 8, 1>}, {transform_indices = @transform_3, window_bounds = array<i64: 1, 8, 128>}]} {
    %cst = arith.constant 0.000000e+00 : f32
    %0 = vector.broadcast %cst : f32 to vector<8x128xf32>
    %c0 = arith.constant 0 : index
    %c0_0 = arith.constant 0 : index
    %c0_1 = arith.constant 0 : index
    %1 = vector.load %arg2[%c0, %c0_0, %c0_1] : memref<3x8x4xbf16, #tpu.memory_space<vmem>>, vector<1x8x4xbf16>
    %2 = vector.shape_cast %1 : vector<1x8x4xbf16> to vector<8x4xbf16>
    %c0_2 = arith.constant 0 : index
    %c0_3 = arith.constant 0 : index
    %c0_4 = arith.constant 0 : index
    %3 = vector.load %arg1[%c0_2, %c0_3, %c0_4] : memref<1x4x130xbf16, #tpu.memory_space<vmem>>, vector<1x4x128xbf16>
    %4 = vector.shape_cast %3 : vector<1x4x128xbf16> to vector<4x128xbf16>
    %cst_5 = arith.constant dense<0.000000e+00> : vector<8x128xf32>
    %5 = tpu.matmul %2, %4, %cst_5 {dimension_numbers = #tpu.dot_dimension_numbers<[1], [0], [0], [1], [0, 0, 1, 1], [], []>} : vector<8x4xbf16>, vector<4x128xbf16>, vector<8x128xf32> -> vector<8x128xf32>
    %6 = arith.addf %0, %5 : vector<8x128xf32>
    %c1 = arith.constant 1 : index
    %c0_6 = arith.constant 0 : index
    %c0_7 = arith.constant 0 : index
    %7 = vector.load %arg2[%c1, %c0_6, %c0_7] : memref<3x8x4xbf16, #tpu.memory_space<vmem>>, vector<1x8x4xbf16>
    %8 = vector.shape_cast %7 : vector<1x8x4xbf16> to vector<8x4xbf16>
    %c0_8 = arith.constant 0 : index
    %c0_9 = arith.constant 0 : index
    %c1_10 = arith.constant 1 : index
    %9 = vector.load %arg1[%c0_8, %c0_9, %c1_10] : memref<1x4x130xbf16, #tpu.memory_space<vmem>>, vector<1x4x128xbf16>
    %10 = vector.shape_cast %9 : vector<1x4x128xbf16> to vector<4x128xbf16>
    %cst_11 = arith.constant dense<0.000000e+00> : vector<8x128xf32>
    %11 = tpu.matmul %8, %10, %cst_11 {dimension_numbers = #tpu.dot_dimension_numbers<[1], [0], [0], [1], [0, 0, 1, 1], [], []>} : vector<8x4xbf16>, vector<4x128xbf16>, vector<8x128xf32> -> vector<8x128xf32>
    %12 = arith.addf %6, %11 : vector<8x128xf32>
    %c2 = arith.constant 2 : index
    %c0_12 = arith.constant 0 : index
    %c0_13 = arith.constant 0 : index
    %13 = vector.load %arg2[%c2, %c0_12, %c0_13] : memref<3x8x4xbf16, #tpu.memory_space<vmem>>, vector<1x8x4xbf16>
    %14 = vector.shape_cast %13 : vector<1x8x4xbf16> to vector<8x4xbf16>
    %c0_14 = arith.constant 0 : index
    %c0_15 = arith.constant 0 : index
    %c2_16 = arith.constant 2 : index
    %15 = vector.load %arg1[%c0_14, %c0_15, %c2_16] : memref<1x4x130xbf16, #tpu.memory_space<vmem>>, vector<1x4x128xbf16>
    %16 = vector.shape_cast %15 : vector<1x4x128xbf16> to vector<4x128xbf16>
    %cst_17 = arith.constant dense<0.000000e+00> : vector<8x128xf32>
    %17 = tpu.matmul %14, %16, %cst_17 {dimension_numbers = #tpu.dot_dimension_numbers<[1], [0], [0], [1], [0, 0, 1, 1], [], []>} : vector<8x4xbf16>, vector<4x128xbf16>, vector<8x128xf32> -> vector<8x128xf32>
    %18 = arith.addf %12, %17 : vector<8x128xf32>
    %c0_18 = arith.constant 0 : index
    %c0_19 = arith.constant 0 : index
    %19 = vector.load %arg3[%c0_18, %c0_19] : memref<8x1xf32, #tpu.memory_space<vmem>>, vector<8x1xf32>
    %20 = vector.broadcast %19 : vector<8x1xf32> to vector<8x128xf32>
    %21 = arith.addf %18, %20 : vector<8x128xf32>
    %cst_20 = arith.constant 0.000000e+00 : f32
    %22 = vector.broadcast %cst_20 : f32 to vector<8x128xf32>
    %23 = arith.maximumf %21, %22 : vector<8x128xf32>
    %c0_21 = arith.constant 0 : index
    %c0_22 = arith.constant 0 : index
    %c0_23 = arith.constant 0 : index
    %24 = vector.load %arg4[%c0_21, %c0_22, %c0_23] : memref<1x8x128xf32, #tpu.memory_space<vmem>>, vector<1x8x128xf32>
    %25 = vector.shape_cast %24 : vector<1x8x128xf32> to vector<8x128xf32>
    %26 = vector.shape_cast %23 : vector<8x128xf32> to vector<1x8x128xf32>
    tpu.vector_store %arg4[%c0_21, %c0_22, %c0_23], %26 {strides = array<i32>} : memref<1x8x128xf32, #tpu.memory_space<vmem>>, vector<1x8x128xf32>,
    return
  }
  func.func @transform_0(%arg0: i32) -> (i32, i32, i32) {
    %c0_i32 = arith.constant 0 : i32
    %c0_i32_0 = arith.constant 0 : i32
    %c0_i32_1 = arith.constant 0 : i32
    return %arg0, %c0_i32, %c0_i32_0 : i32, i32, i32
  }
  func.func @transform_1(%arg0: i32) -> (i32, i32, i32) {
    %c0_i32 = arith.constant 0 : i32
    %c0_i32_0 = arith.constant 0 : i32
    %c0_i32_1 = arith.constant 0 : i32
    %c0_i32_2 = arith.constant 0 : i32
    return %c0_i32, %c0_i32_0, %c0_i32_1 : i32, i32, i32
  }
  func.func @transform_2(%arg0: i32) -> (i32, i32) {
    %c0_i32 = arith.constant 0 : i32
    %c0_i32_0 = arith.constant 0 : i32
    %c0_i32_1 = arith.constant 0 : i32
    return %c0_i32, %c0_i32_0 : i32, i32
  }
  func.func @transform_3(%arg0: i32) -> (i32, i32, i32) {
    %c0_i32 = arith.constant 0 : i32
    %c0_i32_0 = arith.constant 0 : i32
    %c0_i32_1 = arith.constant 0 : i32
    return %arg0, %c0_i32, %c0_i32_0 : i32, i32, i32
  }
}

</mosaic_0001>

<llo_original>
// kernel: tpu_custom_call.1
$region0: #{tpu_custom_call.1}
  #allocation0 [shape = 'u32[]', space=smem, size = 0x4, offset = 0x4, fixed_abs, tag = 'smem constant byte address 0x4 - core index']
  #allocation1 [shape = 'u32[144,128]{1,0:T(1,128)}', space=vmem, size = 0x12000, scoped, tag = 'internal scratch']
  %s0 = inlined_call_operand.vmem [shape: bf16[2,4,130], index: 0, kind: input, shape index: {}]
  %s1 = inlined_call_operand.vmem [shape: bf16[3,8,4], index: 1, kind: input, shape index: {}]
  %s2 = inlined_call_operand.vmem [shape: f32[8,1], index: 2, kind: input, shape index: {}]
  %s3 = inlined_call_operand.hbm [shape: f32[2,8,128], index: 3, kind: output, shape index: {}]
  %s4 = sld [smem:[#allocation0]]
  $region45: #{tpu_custom_call.1} parent=0
    _
  %s6 = ssub.s32 1, %s4
  %s7 = scalar_select 0, %s6, %s4
  $region1: #{tpu_custom_call.1} parent=0
    #allocation2 [shape = 'u8[8192]{0}', space=vmem, size = 0x2000, scoped, tag = 'output window, operand 0']
    #allocation3 [shape = 's32[2]{0}', space=sflag, size = 0x8, scoped, tag = 'scoped memory for tpu_custom_call.1']
    %8 = vsyncpa [#allocation3], 0
    %s9 = scalar_lea.sflag [#allocation3], 1
    %10 = vsyncpa %s9, 0
    loop: start=0, step=1, limit=4
    $region2: #{tpu_custom_call.1} parent=1 // loop_pre_header
      _
    $region3: #{tpu_custom_call.1} parent=1 // loop_header
      %s12 = sphi 0, %s16
      %p13 = scmp.ge.s32.totalorder %s12, 4
      %s22 = sphi 0, %s24
      %s25 = sphi 0, %s22
      %s26 = sphi 0, %s25
      %s42 = sphi 0, %s26
      %s46 = sphi 0, %s46
      %s48 = sphi 0, %s46
      %s49 = sphi 0, %s48
      %s63 = sphi 0, %s49
      %s67 = sphi 0, %s67
      %s69 = sphi 0, %s67
      %s70 = sphi 0, %s69
      %s84 = sphi 0, %s70
      %s90 = sphi 0, %s92
      %s93 = sphi 0, %s90
      %s94 = sphi 0, %s93
      %s110 = sphi 0, %s94
    $region4: #{tpu_custom_call.1} parent=1 // loop_header_branch
      %15 = sbr.rel (%p13) target = $region8
    $region5: #{tpu_custom_call.1} parent=1 // loop_body
      %s17 = ssub.s32 %s12, 1
      %s18 = ssub.s32 %s12, 2
      %s19 = sadd.s32 %s12, 1
      %s20 = ssub.s32 %s12, %s19
      %p21 = scmp.eq.s32.totalorder %s20, 0
      %s23 = sadd.s32 %s22, 1
      %s24 = scalar_select %p21, %s22, %s23
      %p27 = pneg %p21
      %p28 = scmp.eq.s32.totalorder %s12, 1
      %p29 = por %p27, %p28
      %p30 = scmp.ne.s32.totalorder %s22, %s25
      %p31 = scmp.eq.s32.totalorder %s12, 0
      %p32 = por %p30, %p31
      %p33 = scmp.ne.s32.totalorder %s22, %s25
      %p34 = scmp.eq.s32.totalorder %s17, 1
      %p35 = por %p33, %p34
      %p36 = scmp.ne.s32.totalorder %s25, %s26
      %p37 = scmp.eq.s32.totalorder %s17, 0
      %p38 = por %p36, %p37
      %p39 = scmp.ne.s32.totalorder %s25, %s26
      %p40 = scmp.eq.s32.totalorder %s18, 1
      %p41 = por %p39, %p40
      %p43 = scmp.ne.s32.totalorder %s26, %s42
      %p44 = scmp.eq.s32.totalorder %s18, 0
      %p45 = por %p43, %p44
      %s47 = sadd.s32 %s46, 1
      %p50 = scmp.eq.s32.totalorder %s12, 1
      %p51 = scmp.ne.s32.totalorder %s46, %s48
      %p52 = scmp.eq.s32.totalorder %s12, 0
      %p53 = por %p51, %p52
      %p54 = scmp.ne.s32.totalorder %s46, %s48
      %p55 = scmp.eq.s32.totalorder %s17, 1
      %p56 = por %p54, %p55
      %p57 = scmp.ne.s32.totalorder %s48, %s49
      %p58 = scmp.eq.s32.totalorder %s17, 0
      %p59 = por %p57, %p58
      %p60 = scmp.ne.s32.totalorder %s48, %s49
      %p61 = scmp.eq.s32.totalorder %s18, 1
      %p62 = por %p60, %p61
      %p64 = scmp.ne.s32.totalorder %s49, %s63
      %p65 = scmp.eq.s32.totalorder %s18, 0
      %p66 = por %p64, %p65
      %s68 = sadd.s32 %s67, 1
      %p71 = scmp.eq.s32.totalorder %s12, 1
      %p72 = scmp.ne.s32.totalorder %s67, %s69
      %p73 = scmp.eq.s32.totalorder %s12, 0
      %p74 = por %p72, %p73
      %p75 = scmp.ne.s32.totalorder %s67, %s69
      %p76 = scmp.eq.s32.totalorder %s17, 1
      %p77 = por %p75, %p76
      %p78 = scmp.ne.s32.totalorder %s69, %s70
      %p79 = scmp.eq.s32.totalorder %s17, 0
      %p80 = por %p78, %p79
      %p81 = scmp.ne.s32.totalorder %s69, %s70
      %p82 = scmp.eq.s32.totalorder %s18, 1
      %p83 = por %p81, %p82
      %p85 = scmp.ne.s32.totalorder %s70, %s84
      %p86 = scmp.eq.s32.totalorder %s18, 0
      %p87 = por %p85, %p86
      %s88 = ssub.s32 %s12, %s19
      %p89 = scmp.eq.s32.totalorder %s88, 0
      %s91 = sadd.s32 %s90, 1
      %s92 = scalar_select %p89, %s90, %s91
      %p95 = pneg %p89
      %p96 = scmp.eq.s32.totalorder %s12, 1
      %p97 = por %p95, %p96
      %p98 = scmp.ne.s32.totalorder %s90, %s93
      %p99 = scmp.eq.s32.totalorder %s12, 0
      %p100 = por %p98, %p99
      %p101 = scmp.ne.s32.totalorder %s90, %s93
      %p102 = scmp.eq.s32.totalorder %s17, 1
      %p103 = por %p101, %p102
      %p104 = scmp.ne.s32.totalorder %s93, %s94
      %p105 = scmp.eq.s32.totalorder %s17, 0
      %p106 = por %p104, %p105
      %p107 = scmp.ne.s32.totalorder %s93, %s94
      %p108 = scmp.eq.s32.totalorder %s18, 1
      %p109 = por %p107, %p108
      %p111 = scmp.ne.s32.totalorder %s94, %s110
      %p112 = scmp.eq.s32.totalorder %s18, 0
      %p113 = por %p111, %p112
      %p114 = scmp.le.s32.totalorder 1, %s12
      %p115 = scmp.lt.s32.totalorder %s12, 3
      %p116 = pnand %p114, %p115
      %p117 = pneg %p116
      // Predicated region
      $region9: #{tpu_custom_call.1} parent=5 // pred_check
        _
      $region10: #{tpu_custom_call.1} parent=5 // pred_check_branch
        %119 = sbr.rel (%p116) target = $region12
      $region11: #{tpu_custom_call.1} parent=5 // pred_region
        %s120 = ssub.s32 %s12, 1
        // Predicated region
        $region13: #{tpu_custom_call.1} parent=11 // pred_check
          %p121 = pneg %p59
        $region14: #{tpu_custom_call.1} parent=11 // pred_check_branch
          %123 = sbr.rel (%p121) target = $region16
        $region15: #{tpu_custom_call.1} parent=11 // pred_region
          _
        $region16: #{tpu_custom_call.1} parent=11 // pred_fallthru
          _
        // Predicated region
        $region17: #{tpu_custom_call.1} parent=11 // pred_check
          %p124 = pneg %p80
        $region18: #{tpu_custom_call.1} parent=11 // pred_check_branch
          %126 = sbr.rel (%p124) target = $region20
        $region19: #{tpu_custom_call.1} parent=11 // pred_region
          _
        $region20: #{tpu_custom_call.1} parent=11 // pred_fallthru
          _
      $region12: #{tpu_custom_call.1} parent=5 // pred_fallthru
        _
      %p127 = scmp.lt.s32.totalorder %s12, 2
      // Predicated region
      $region21: #{tpu_custom_call.1} parent=5 // pred_check
        %p128 = pneg %p127
      $region22: #{tpu_custom_call.1} parent=5 // pred_check_branch
        %130 = sbr.rel (%p128) target = $region24
      $region23: #{tpu_custom_call.1} parent=5 // pred_region
        // Predicated region
        $region25: #{tpu_custom_call.1} parent=23 // pred_check
          %p131 = pneg %p32
        $region26: #{tpu_custom_call.1} parent=23 // pred_check_branch
          %133 = sbr.rel (%p131) target = $region28
        $region27: #{tpu_custom_call.1} parent=23 // pred_region
          %p134 = scmp.lt.s32.totalorder %s12, 1
          %s135 = scalar_select %p134, %s12, 1
          %s136 = smul.addr %s135, 2
          %s137 = smul.addr %s136, 2
          %s138 = scalar_lea.vmem %s0, %s137
        $region28: #{tpu_custom_call.1} parent=23 // pred_fallthru
          _
      $region24: #{tpu_custom_call.1} parent=5 // pred_fallthru
        _
      %p139 = scmp.le.s32.totalorder 1, %s12
      %p140 = scmp.lt.s32.totalorder %s12, 3
      %p141 = pnand %p139, %p140
      %p142 = pneg %p141
      // Predicated region
      $region29: #{tpu_custom_call.1} parent=5 // pred_check
        _
      $region30: #{tpu_custom_call.1} parent=5 // pred_check_branch
        %144 = sbr.rel (%p141) target = $region32
      $region31: #{tpu_custom_call.1} parent=5 // pred_region
        %s145 = ssub.s32 %s12, 1
        %p146 = scmp.lt.s32.totalorder %s17, 1
        %s147 = scalar_select %p146, %s17, 1
        %s148 = smul.addr %s147, 2
        %s149 = smul.addr %s148, 2
        %s150 = scalar_lea.vmem %s0, %s149
        %p151 = pneg %p38
        %p152 = pneg %p35
        %p153 = pneg %p59
        %p154 = pneg %p56
        %p155 = pneg %p80
        %p156 = pneg %p77
        %p157 = pneg %p106
        %p158 = pneg %p103
        %s159 = sand.u32 %s93, 1
        %s160 = scalar_lea.sflag [#allocation3], %s159
        %s161 = sand.u32 %s93, 1
        %s162 = smul.addr %s161, 8
        %s163 = scalar_lea.vmem [#allocation2], %s162
        %p164 = scmp.lt.s32.totalorder %s17, 1
        %s165 = scalar_select %p164, %s17, 1
        %s166 = smul.addr %s165, 2
        %s167 = smul.addr %s166, 2
        %s168 = scalar_lea.vmem %s0, %s167
        %v170 = vld [vmem:[%s1] sm:$0xf]
        %v171 = vld [vmem:[%s168] sm:$0x3]
        %s172 = scalar_lea.vmem %s1, 4
        %v173 = vld [vmem:[%s172] sm:$0xf]
        %v174 = vld [vmem:[%s168] sm:$0xf]
        %v177 = vunpack.c.l.s4 1983009808
        %v178 = vunpack.c.0.s8 %v177
        %v179 = vlaneseq
        %v180 = vshrl.u32 %v179, 7
        %v181 = vsub.s32 %v178, %v180
        %v182 = vrot.slane %v174, %v181
        %v183 = vcombine.high %v182, %v182
        %184 = vrot.lane.b32.xlu0 %v182, 127
        %v185 = vpop.permute.xlu0 %184
        %186 = vrot.lane.b32.xlu0 %v183, 127
        %v187 = vpop.permute.xlu0 %186
        %vm188 = vcmask 1039360
        %v189 = vsel %vm188, %v185, %v187
        %vm190 = vcmask 31744
        %v192 = vsel %vm190, %v173, 0
        %vm194 = vcmask 1041408
        %v196 = vsel %vm194, %v189, 0
        %198 = vmatprep.subr.bf16.mxu0 0
        %199 = vmatpush1.bf16.msra.mxu0 0
        %200 = vmatprep.subr.bf16.mxu0 0
        %201 = vmatpush1.bf16.msra.mxu0 0
        %202 = vmatprep.subr.bf16.mxu0 0
        %203 = vmatpush1.bf16.msra.mxu0 0
        %204 = vmatprep.subr.bf16.mxu0 0
        %205 = vmatpush1.bf16.msra.mxu0 0
        %206 = vmatprep.subr.bf16.mxu0 0
        %207 = vmatpush1.bf16.msra.mxu0 0
        %208 = vmatprep.subr.bf16.mxu0 0
        %209 = vmatpush1.bf16.msra.mxu0 0
        %210 = vmatprep.subr.bf16.mxu0 0
        %211 = vmatpush1.bf16.msra.mxu0 0
        %212 = vmatprep.subr.bf16.mxu0 0
        %213 = vmatpush1.bf16.msra.mxu0 %v196
        %214 = vmatprep.subr.bf16.mxu0 0
        %215 = vmatpush2.bf16.msra.mxu0 0
        %216 = vmatprep.subr.bf16.mxu0 0
        %217 = vmatpush2.bf16.msra.mxu0 0
        %218 = vmatprep.subr.bf16.mxu0 0
        %219 = vmatpush2.bf16.msra.mxu0 0
        %220 = vmatprep.subr.bf16.mxu0 0
        %221 = vmatpush2.bf16.msra.mxu0 0
        %222 = vmatprep.subr.bf16.mxu0 0
        %223 = vmatpush2.bf16.msra.mxu0 0
        %224 = vmatprep.subr.bf16.mxu0 0
        %225 = vmatpush2.bf16.msra.mxu0 0
        %226 = vmatprep.subr.bf16.mxu0 0
        %227 = vmatpush2.bf16.msra.mxu0 0
        %228 = vmatprep.subr.bf16.mxu0 0
        %229 = vmatpush2.bf16.msra.mxu0 0
        %230 = vmatprep.mubr.bf16.mxu0 0
        %231 = vmatmul.mubr.bf16.gmra.mxu0 %v192
        %v232 = vpop.f32.mrf.mxu0
        %v233 = vadd.f32 0.0, %v232
        %v234 = vpop.f32.mrf.mxu0
        %v235 = vpop.f32.mrf.mxu0
        %v236 = vpop.f32.mrf.mxu0
        %237 = vdwg.mxu0
        %v239 = vsel %vm190, %v170, 0
        %v242 = vsel %vm194, %v171, 0
        %244 = vmatprep.subr.bf16.mxu0 0
        %245 = vmatpush1.bf16.msra.mxu0 0
        %246 = vmatprep.subr.bf16.mxu0 0
        %247 = vmatpush1.bf16.msra.mxu0 0
        %248 = vmatprep.subr.bf16.mxu0 0
        %249 = vmatpush1.bf16.msra.mxu0 0
        %250 = vmatprep.subr.bf16.mxu0 0
        %251 = vmatpush1.bf16.msra.mxu0 0
        %252 = vmatprep.subr.bf16.mxu0 0
        %253 = vmatpush1.bf16.msra.mxu0 0
        %254 = vmatprep.subr.bf16.mxu0 0
        %255 = vmatpush1.bf16.msra.mxu0 0
        %256 = vmatprep.subr.bf16.mxu0 0
        %257 = vmatpush1.bf16.msra.mxu0 0
        %258 = vmatprep.subr.bf16.mxu0 0
        %259 = vmatpush1.bf16.msra.mxu0 %v242
        %260 = vmatprep.subr.bf16.mxu0 0
        %261 = vmatpush2.bf16.msra.mxu0 0
        %262 = vmatprep.subr.bf16.mxu0 0
        %263 = vmatpush2.bf16.msra.mxu0 0
        %264 = vmatprep.subr.bf16.mxu0 0
        %265 = vmatpush2.bf16.msra.mxu0 0
        %266 = vmatprep.subr.bf16.mxu0 0
        %267 = vmatpush2.bf16.msra.mxu0 0
        %268 = vmatprep.subr.bf16.mxu0 0
        %269 = vmatpush2.bf16.msra.mxu0 0
        %270 = vmatprep.subr.bf16.mxu0 0
        %271 = vmatpush2.bf16.msra.mxu0 0
        %272 = vmatprep.subr.bf16.mxu0 0
        %273 = vmatpush2.bf16.msra.mxu0 0
        %274 = vmatprep.subr.bf16.mxu0 0
        %275 = vmatpush2.bf16.msra.mxu0 0
        %276 = vmatprep.mubr.bf16.mxu0 0
        %277 = vmatmul.mubr.bf16.gmra.mxu0 %v239
        %v278 = vpop.f32.mrf.mxu0
        %v279 = vadd.f32 %v233, %v278
        %v280 = vpop.f32.mrf.mxu0
        %v281 = vpop.f32.mrf.mxu0
        %v282 = vpop.f32.mrf.mxu0
        %283 = vdwg.mxu0
        %s284 = scalar_lea.vmem %s1, 8
        %v285 = vld [vmem:[%s284] sm:$0xf]
        %v286 = vld [vmem:[%s168] sm:$0xf]
        %v289 = vunpack.c.l.s4 1983009808
        %v290 = vunpack.c.0.s8 %v289
        %v291 = vlaneseq
        %v292 = vshrl.u32 %v291, 7
        %v293 = vsub.s32 %v290, %v292
        %v294 = vrot.slane %v286, %v293
        %v295 = vcombine.high %v294, %v294
        %296 = vrot.lane.b32.xlu0 %v294, 126
        %v297 = vpop.permute.xlu0 %296
        %298 = vrot.lane.b32.xlu0 %v295, 126
        %v299 = vpop.permute.xlu0 %298
        %vm300 = vcmask 1031168
        %v301 = vsel %vm300, %v297, %v299
        %v303 = vsel %vm190, %v285, 0
        %v306 = vsel %vm194, %v301, 0
        %308 = vmatprep.subr.bf16.mxu0 0
        %309 = vmatpush1.bf16.msra.mxu0 0
        %310 = vmatprep.subr.bf16.mxu0 0
        %311 = vmatpush1.bf16.msra.mxu0 0
        %312 = vmatprep.subr.bf16.mxu0 0
        %313 = vmatpush1.bf16.msra.mxu0 0
        %314 = vmatprep.subr.bf16.mxu0 0
        %315 = vmatpush1.bf16.msra.mxu0 0
        %316 = vmatprep.subr.bf16.mxu0 0
        %317 = vmatpush1.bf16.msra.mxu0 0
        %318 = vmatprep.subr.bf16.mxu0 0
        %319 = vmatpush1.bf16.msra.mxu0 0
        %320 = vmatprep.subr.bf16.mxu0 0
        %321 = vmatpush1.bf16.msra.mxu0 0
        %322 = vmatprep.subr.bf16.mxu0 0
        %323 = vmatpush1.bf16.msra.mxu0 %v306
        %324 = vmatprep.subr.bf16.mxu0 0
        %325 = vmatpush2.bf16.msra.mxu0 0
        %326 = vmatprep.subr.bf16.mxu0 0
        %327 = vmatpush2.bf16.msra.mxu0 0
        %328 = vmatprep.subr.bf16.mxu0 0
        %329 = vmatpush2.bf16.msra.mxu0 0
        %330 = vmatprep.subr.bf16.mxu0 0
        %331 = vmatpush2.bf16.msra.mxu0 0
        %332 = vmatprep.subr.bf16.mxu0 0
        %333 = vmatpush2.bf16.msra.mxu0 0
        %334 = vmatprep.subr.bf16.mxu0 0
        %335 = vmatpush2.bf16.msra.mxu0 0
        %336 = vmatprep.subr.bf16.mxu0 0
        %337 = vmatpush2.bf16.msra.mxu0 0
        %338 = vmatprep.subr.bf16.mxu0 0
        %339 = vmatpush2.bf16.msra.mxu0 0
        %340 = vmatprep.mubr.bf16.mxu0 0
        %341 = vmatmul.mubr.bf16.gmra.mxu0 %v303
        %v342 = vpop.f32.mrf.mxu0
        %v343 = vadd.f32 0.0, %v342
        %v344 = vpop.f32.mrf.mxu0
        %v345 = vpop.f32.mrf.mxu0
        %v346 = vpop.f32.mrf.mxu0
        %347 = vdwg.mxu0
        %v348 = vadd.f32 %v279, %v343
        %v349 = vld [vmem:[%s2] sm:$0xff]
        %351 = vset.pattern.permute.xlu0 0
        %352 = vperm.xlu0 %351, %v349
        %v353 = vpop.permute.xlu0 %352
        %v355 = vadd.f32 %v348, %v353
        %v356 = vmax.f32 %v355, 0.0
        %357 = vst [vmem:[%s163] sm:$0xff] %v356
        %s358 = sand.u32 %s93, 1
        %s359 = scalar_lea.sflag [#allocation3], %s358
        %s360 = sand.u32 %s93, 1
        %s361 = smul.addr %s360, 8
        %s362 = scalar_lea.vmem [#allocation2], %s361
        // Predicated region
        $region33: #{tpu_custom_call.1} parent=31 // pred_check
          %p363 = pneg %p103
        $region34: #{tpu_custom_call.1} parent=31 // pred_check_branch
          %365 = sbr.rel (%p363) target = $region36
        $region35: #{tpu_custom_call.1} parent=31 // pred_region
          %s367 = ssub.s32 128, 128
          %368 = vsyncadd %s359, %s367
          %s369 = smul.addr %s17, 128
          %s370 = scalar_lea.hbm %s3, %s369
          %s372 = sshll.u32 %s362, 4
          %s373 = int_to_ptr.vmem [resolvable:$true] %s372
          %375 = dma.vmem_to_hbm [thread:$0]  %s373, 128, %s370, %s359
        $region36: #{tpu_custom_call.1} parent=31 // pred_fallthru
          _
      $region32: #{tpu_custom_call.1} parent=5 // pred_fallthru
        _
      %p376 = scmp.le.s32.totalorder 2, %s12
      // Predicated region
      $region37: #{tpu_custom_call.1} parent=5 // pred_check
        %p377 = pneg %p376
      $region38: #{tpu_custom_call.1} parent=5 // pred_check_branch
        %379 = sbr.rel (%p377) target = $region40
      $region39: #{tpu_custom_call.1} parent=5 // pred_region
        %s380 = ssub.s32 %s12, 2
        // Predicated region
        $region41: #{tpu_custom_call.1} parent=39 // pred_check
          %p381 = pneg %p109
        $region42: #{tpu_custom_call.1} parent=39 // pred_check_branch
          %383 = sbr.rel (%p381) target = $region44
        $region43: #{tpu_custom_call.1} parent=39 // pred_region
          %s384 = sand.u32 %s94, 1
          %s385 = scalar_lea.sflag [#allocation3], %s384
          %s386 = sand.u32 %s94, 1
          %s387 = smul.addr %s386, 8
          %s388 = scalar_lea.vmem [#allocation2], %s387
          %389 = dma.done %s385, 128
        $region44: #{tpu_custom_call.1} parent=39 // pred_fallthru
          _
      $region40: #{tpu_custom_call.1} parent=5 // pred_fallthru
        _
    $region6: #{tpu_custom_call.1} parent=1 // loop_footer
      %s16 = sadd.s32 1, %s12
    $region7: #{tpu_custom_call.1} parent=1 // loop_footer_branch
      %11 = sbr.rel target = $region3
    $region8: #{tpu_custom_call.1} parent=1 // loop_exit
      _
    %390 = vsyncpa [#allocation3], 1
    %s391 = scalar_lea.sflag [#allocation3], 1
    %392 = vsyncpa %s391, 1

</llo_original>
